<compile_context>
chip_gen: v6e
topology: v6e:2x2x1
jax: 0.10.0
libtpu: 0.0.40
codegen_flags: <defaults>
</compile_context>

<pallas_src>
import jax
import jax.numpy as jnp
from jax.experimental import pallas as pl
from jax.experimental.pallas import tpu as pltpu

# ------------------------------ hyper-params -----------------------------------
EMBED = 32
HEADS = 4
HEAD_DIM = EMBED // HEADS
EXPANSION = 4
FF_DIM = EMBED * EXPANSION
BATCH = 2
SEQ = 8

MXU_DTYPE = jnp.bfloat16                  # bf16 MXU operands, f32 accumulation
LN_EPS = 1e-5                             # PyTorch nn.LayerNorm default
ATTN_SCALE = 1.0 / float(EMBED) ** 0.5    # reference divides by sqrt(embed_size)
MASK_FILL = -1e20 * ATTN_SCALE            # masked_fill(-1e20) happens pre-scale


# ------------------------------ shared helpers ----------------------------------
def _mm(a, b):
    """MXU matmul: bf16 operands, f32 accumulation. Works in-kernel and in JAX."""
    return jnp.dot(a.astype(MXU_DTYPE), b.astype(MXU_DTYPE),
                   preferred_element_type=jnp.float32)


def _layernorm(x, gamma, beta):
    mu = jnp.mean(x, axis=-1, keepdims=True)
    var = jnp.mean((x - mu) * (x - mu), axis=-1, keepdims=True)
    return (x - mu) * jax.lax.rsqrt(var + LN_EPS) * gamma + beta


# --------------------------------- fused kernel ---------------------------------
def _make_kernel(bq, bk):
    """bq = batch*q_len rows, bk = batch*k_len rows (batch folded into sublanes)."""
    E, H, D = EMBED, HEADS, HEAD_DIM

    def kernel(x_ref, bias_ref, w_ref, wff1_ref, wff2_ref, vec_ref, o_ref):
        x_all = x_ref[...]                       # (bq+2*bk, E) = [query; key; value]
        xq = x_all[0:bq, :]                      # residual stream (bq, E)

        # ---- fused Q/K/V projections: ONE matmul against the (E, 4E) weight slab.
        # Slab columns: [Wq_bd*scale | Wk_bd | Wv_bd | Wo]; only the diagonal
        # (row-block, col-block) products of `res` are used.
        w_full = w_ref[...]                      # (32, 128)
        res = _mm(x_all, w_full)                 # (bq+2bk, 4E)
        q = res[0:bq, 0:E]                       # already scaled by 1/sqrt(E)
        k = res[bq:bq + bk, E:2 * E]
        v = res[bq + bk:bq + 2 * bk, 2 * E:3 * E]

        # ---- pack all heads along sublanes: (L, H*D) -> (H*L, D).
        q_hs = jnp.concatenate([q[:, h * D:(h + 1) * D] for h in range(H)], axis=0)
        k_hs = jnp.concatenate([k[:, h * D:(h + 1) * D] for h in range(H)], axis=0)
        v_hs = jnp.concatenate([v[:, h * D:(h + 1) * D] for h in range(H)], axis=0)

        # ---- attention for all heads + all batches: 2 MXU matmuls, 1 softmax.
        s = jnp.einsum("qd,kd->qk",
                       q_hs.astype(MXU_DTYPE), k_hs.astype(MXU_DTYPE),
                       preferred_element_type=jnp.float32)   # (H*bq, H*bk)
        s = s + bias_ref[...]        # additive bias: causal + cross-head/batch
        s = s - jnp.max(s, axis=-1, keepdims=True)
        p = jnp.exp(s)
        p = p * pl.reciprocal(jnp.sum(p, axis=-1, keepdims=True), approx=True)
        ctx = _mm(p, v_hs)                                    # (H*bq, D)

        # ---- unpack heads back onto lanes: (H*bq, D) -> (bq, E).
        attn = jnp.concatenate([ctx[h * bq:(h + 1) * bq, :] for h in range(H)],
                               axis=1)

        # packed vectors: row0 = b_ff1; row1 = [bo|g1|b1|g2]; row2 = [b2|b_ff2|0|0]
        bff1 = vec_ref[0:1, :]
        bo = vec_ref[1:2, 0:E]
        g1 = vec_ref[1:2, E:2 * E]
        b1 = vec_ref[1:2, 2 * E:3 * E]
        g2 = vec_ref[1:2, 3 * E:4 * E]
        b2 = vec_ref[2:3, 0:E]
        bff2 = vec_ref[2:3, E:2 * E]

        attn = _mm(attn, w_full[:, 3 * E:4 * E]) + bo         # fc_out (+ bias)

        # x = LayerNorm1(attn + query)   (dropout = identity in eval mode)
        x = _layernorm(attn + xq, g1, b1)

        # feed-forward: hidden (bq, 4E) stays in vregs/VMEM.
        h1 = jnp.maximum(_mm(x, wff1_ref[...]) + bff1, 0.0)
        ff = _mm(h1, wff2_ref[...]) + bff2

        # out = LayerNorm2(ff + x)
        o_ref[...] = _layernorm(ff + x, g2, b2)

    return kernel


# --------------------------------- wrapper --------------------------------------
def transformer_block_forward(value, key, query, mask, params):
    n, q_len, e = query.shape
    k_len = key.shape[1]
    assert e == EMBED and value.shape == key.shape
    assert FF_DIM == 4 * EMBED  # packed-vector layout assumes 4x expansion

    bq, bk = n * q_len, n * k_len

    # ---- fold batch into sublanes and stack [query; key; value] along sublanes.
    x_stacked = jnp.concatenate([query.reshape(bq, EMBED),
                                 key.reshape(bk, EMBED),
                                 value.reshape(bk, EMBED)], axis=0)

    # ---- block-diagonal per-head projection weights -> one lane-dense slab.
    eye_h = jnp.eye(HEADS, dtype=jnp.float32)
    wq_bd = jnp.kron(eye_h, params["wq"]) * jnp.float32(ATTN_SCALE)  # scale folded
    wk_bd = jnp.kron(eye_h, params["wk"])
    wv_bd = jnp.kron(eye_h, params["wv"])
    w_slab = jnp.concatenate([wq_bd, wk_bd, wv_bd, params["wo"]], axis=1)  # (32,128)

    # ---- additive attention bias for the packed (head, batch, seq) layout:
    # keep[(h,b,q),(h',b',k)] iff h==h' and b==b' and mask[b,q,k] != 0.
    if mask is None:
        mask = jnp.ones((n, q_len, k_len), jnp.float32)
    hh = jnp.eye(HEADS, dtype=jnp.float32)
    bb = jnp.eye(n, dtype=jnp.float32)
    keep = (hh[:, None, None, :, None, None]
            * bb[None, :, None, None, :, None]
            * mask[None, :, :, None, None, :].astype(jnp.float32))
    keep = keep.reshape(HEADS * bq, HEADS * bk)
    bias = jnp.where(keep > 0.0, jnp.float32(0.0), jnp.float32(MASK_FILL))

    # ---- pack all bias / LayerNorm vectors into one (8, 128) lane-dense tile.
    row0 = params["b_ff1"]                                           # (128,)
    row1 = jnp.concatenate([params["bo"], params["g1"],
                            params["b1"], params["g2"]])             # (128,)
    row2 = jnp.concatenate([params["b2"], params["b_ff2"],
                            jnp.zeros((2 * EMBED,), jnp.float32)])   # (128,)
    vecs = jnp.concatenate([row0[None], row1[None], row2[None],
                            jnp.zeros((5, FF_DIM), jnp.float32)], axis=0)

    kernel = _make_kernel(bq, bk)

    def full(shape):
        return pl.BlockSpec(shape, lambda i: (0,) * len(shape))

    out = pl.pallas_call(
        kernel,
        out_shape=jax.ShapeDtypeStruct((bq, EMBED), jnp.float32),
        grid=(1,),                              # whole problem in one grid step
        in_specs=[
            full((bq + 2 * bk, EMBED)),         # stacked [query; key; value]
            full((HEADS * bq, HEADS * bk)),     # additive attention bias
            full((EMBED, 4 * EMBED)),           # [Wq_bd*s | Wk_bd | Wv_bd | Wo]
            full((EMBED, FF_DIM)),              # w_ff1
            full((FF_DIM, EMBED)),              # w_ff2
            full((8, FF_DIM)),                  # packed bias/gamma/beta vectors
        ],
        out_specs=full((bq, EMBED)),
        compiler_params=pltpu.CompilerParams(
            dimension_semantics=("arbitrary",)),
    )(x_stacked, bias, w_slab, params["w_ff1"], params["w_ff2"], vecs)

    return out.reshape(n, q_len, EMBED)


# --------------------------- pure-JAX reference (spec) ---------------------------
def reference_forward(value, key, query, mask, p):
    n, q_len, _ = query.shape
    k_len = key.shape[1]
    vs = value.reshape(n, k_len, HEADS, HEAD_DIM)
    ks = key.reshape(n, k_len, HEADS, HEAD_DIM)
    qs = query.reshape(n, q_len, HEADS, HEAD_DIM)
    qs = _mm(qs, p["wq"])
    ks = _mm(ks, p["wk"])
    vs = _mm(vs, p["wv"])
    match = jnp.einsum("nqhd,nkhd->nhqk",
                       qs.astype(MXU_DTYPE), ks.astype(MXU_DTYPE),
                       preferred_element_type=jnp.float32)
    match = jnp.where(mask[:, None, :, :] == 0.0, jnp.float32(-1e20), match)
    att = jax.nn.softmax(match * ATTN_SCALE, axis=3)
    out = jnp.einsum("nhqk,nkhd->nqhd",
                     att.astype(MXU_DTYPE), vs.astype(MXU_DTYPE),
                     preferred_element_type=jnp.float32)
    out = out.reshape(n, q_len, EMBED)
    attn = _mm(out, p["wo"]) + p["bo"]
    x = _layernorm(attn + query, p["g1"], p["b1"])
    h1 = jnp.maximum(_mm(x, p["w_ff1"]) + p["b_ff1"], 0.0)
    ff = _mm(h1, p["w_ff2"]) + p["b_ff2"]
    return _layernorm(ff + x, p["g2"], p["b2"])


# ------------------------------ deterministic init -------------------------------
def init_params(key):
    ks = jax.random.split(key, 7)
    return {
        "wq": 0.05 * jax.random.normal(ks[0], (HEAD_DIM, HEAD_DIM), jnp.float32),
        "wk": 0.05 * jax.random.normal(ks[1], (HEAD_DIM, HEAD_DIM), jnp.float32),
        "wv": 0.05 * jax.random.normal(ks[2], (HEAD_DIM, HEAD_DIM), jnp.float32),
        "wo": 0.05 * jax.random.normal(ks[3], (EMBED, EMBED), jnp.float32),
        "bo": 0.01 * jax.random.normal(ks[4], (EMBED,), jnp.float32),
        "g1": jnp.ones((EMBED,), jnp.float32),
        "b1": jnp.zeros((EMBED,), jnp.float32),
        "g2": jnp.ones((EMBED,), jnp.float32),
        "b2": jnp.zeros((EMBED,), jnp.float32),
        "w_ff1": 0.05 * jax.random.normal(ks[5], (EMBED, FF_DIM), jnp.float32),
        "b_ff1": jnp.zeros((FF_DIM,), jnp.float32),
        "w_ff2": 0.05 * jax.random.normal(ks[6], (FF_DIM, EMBED), jnp.float32),
        "b_ff2": jnp.zeros((EMBED,), jnp.float32),
    }


# ------------------------------------ main ---------------------------------------
if __name__ == "__main__":
    root = jax.random.PRNGKey(0)
    k_x, k_par = jax.random.split(root, 2)

    x = 0.1 * jax.random.normal(k_x, (BATCH, SEQ, EMBED), jnp.float32)
    value, key, query = x, x, x
    # causal mask shared across heads (1 = keep, 0 = masked)
    mask = jnp.broadcast_to(jnp.tril(jnp.ones((SEQ, SEQ), jnp.float32)),
                            (BATCH, SEQ, SEQ))

    params = init_params(k_par)

    fwd = jax.jit(transformer_block_forward)
    out = jax.block_until_ready(fwd(value, key, query, mask, params))

    ref = reference_forward(value, key, query, mask, params)

    assert out.shape == (BATCH, SEQ, EMBED)
    assert bool(jnp.all(jnp.isfinite(out)))
    assert bool(jnp.allclose(out, ref, rtol=2e-2, atol=2e-2)), \
        float(jnp.max(jnp.abs(out - ref)))
    print("KERNEL_OK")
</pallas_src>

<mosaic_0001>
module attributes {stable_mosaic.version = 11 : i64} {
  func.func @kernel(%arg0: i32, %arg1: memref<48x32xf32, #tpu.memory_space<vmem>>, %arg2: memref<64x64xf32, #tpu.memory_space<vmem>>, %arg3: memref<32x128xf32, #tpu.memory_space<vmem>>, %arg4: memref<32x128xf32, #tpu.memory_space<vmem>>, %arg5: memref<128x32xf32, #tpu.memory_space<vmem>>, %arg6: memref<8x128xf32, #tpu.memory_space<vmem>>, %arg7: memref<16x32xf32, #tpu.memory_space<vmem>>) attributes {dimension_semantics = [#tpu.dimension_semantics<arbitrary>], iteration_bounds = array<i64: 1>, scalar_prefetch = 0 : i64, scratch_operands = 0 : i64, tpu.core_type = #tpu.core_type<tc>, window_params = [{pipeline_mode = #tpu.pipeline_mode<synchronous>, transform_indices = @transform_0, window_bounds = array<i64: 48, 32>}, {pipeline_mode = #tpu.pipeline_mode<synchronous>, transform_indices = @transform_1, window_bounds = array<i64: 64, 64>}, {pipeline_mode = #tpu.pipeline_mode<synchronous>, transform_indices = @transform_2, window_bounds = array<i64: 32, 128>}, {pipeline_mode = #tpu.pipeline_mode<synchronous>, transform_indices = @transform_3, window_bounds = array<i64: 32, 128>}, {pipeline_mode = #tpu.pipeline_mode<synchronous>, transform_indices = @transform_4, window_bounds = array<i64: 128, 32>}, {pipeline_mode = #tpu.pipeline_mode<synchronous>, transform_indices = @transform_5, window_bounds = array<i64: 8, 128>}, {pipeline_mode = #tpu.pipeline_mode<synchronous>, transform_indices = @transform_6, window_bounds = array<i64: 16, 32>}]} {
    %c0 = arith.constant 0 : index
    %c0_0 = arith.constant 0 : index
    %0 = vector.load %arg1[%c0, %c0_0] : memref<48x32xf32, #tpu.memory_space<vmem>>, vector<48x32xf32>
    %1 = vector.extract_strided_slice %0 {offsets = [0, 0], sizes = [16, 32], strides = [1, 1]} : vector<48x32xf32> to vector<16x32xf32>
    %c0_1 = arith.constant 0 : index
    %c0_2 = arith.constant 0 : index
    %2 = vector.load %arg3[%c0_1, %c0_2] : memref<32x128xf32, #tpu.memory_space<vmem>>, vector<32x128xf32>
    %3 = arith.truncf %0 : vector<48x32xf32> to vector<48x32xbf16>
    %4 = arith.truncf %2 : vector<32x128xf32> to vector<32x128xbf16>
    %cst = arith.constant dense<0.000000e+00> : vector<48x128xf32>
    %5 = tpu.matmul %3, %4, %cst {dimension_numbers = #tpu.dot_dimension_numbers<[1], [0], [0], [1], [0, 0, 1, 1], [], []>} : vector<48x32xbf16>, vector<32x128xbf16>, vector<48x128xf32> -> vector<48x128xf32>
    %6 = vector.extract_strided_slice %5 {offsets = [0, 0], sizes = [16, 32], strides = [1, 1]} : vector<48x128xf32> to vector<16x32xf32>
    %7 = vector.extract_strided_slice %5 {offsets = [16, 32], sizes = [16, 32], strides = [1, 1]} : vector<48x128xf32> to vector<16x32xf32>
    %8 = vector.extract_strided_slice %5 {offsets = [32, 64], sizes = [16, 32], strides = [1, 1]} : vector<48x128xf32> to vector<16x32xf32>
    %9 = vector.extract_strided_slice %6 {offsets = [0, 0], sizes = [16, 8], strides = [1, 1]} : vector<16x32xf32> to vector<16x8xf32>
    %10 = vector.extract_strided_slice %6 {offsets = [0, 8], sizes = [16, 8], strides = [1, 1]} : vector<16x32xf32> to vector<16x8xf32>
    %11 = vector.extract_strided_slice %6 {offsets = [0, 16], sizes = [16, 8], strides = [1, 1]} : vector<16x32xf32> to vector<16x8xf32>
    %12 = vector.extract_strided_slice %6 {offsets = [0, 24], sizes = [16, 8], strides = [1, 1]} : vector<16x32xf32> to vector<16x8xf32>
    %13 = tpu.concatenate %9, %10, %11, %12 in 0 : vector<16x8xf32>, vector<16x8xf32>, vector<16x8xf32>, vector<16x8xf32> -> vector<64x8xf32>
    %14 = vector.extract_strided_slice %7 {offsets = [0, 0], sizes = [16, 8], strides = [1, 1]} : vector<16x32xf32> to vector<16x8xf32>
    %15 = vector.extract_strided_slice %7 {offsets = [0, 8], sizes = [16, 8], strides = [1, 1]} : vector<16x32xf32> to vector<16x8xf32>
    %16 = vector.extract_strided_slice %7 {offsets = [0, 16], sizes = [16, 8], strides = [1, 1]} : vector<16x32xf32> to vector<16x8xf32>
    %17 = vector.extract_strided_slice %7 {offsets = [0, 24], sizes = [16, 8], strides = [1, 1]} : vector<16x32xf32> to vector<16x8xf32>
    %18 = tpu.concatenate %14, %15, %16, %17 in 0 : vector<16x8xf32>, vector<16x8xf32>, vector<16x8xf32>, vector<16x8xf32> -> vector<64x8xf32>
    %19 = vector.extract_strided_slice %8 {offsets = [0, 0], sizes = [16, 8], strides = [1, 1]} : vector<16x32xf32> to vector<16x8xf32>
    %20 = vector.extract_strided_slice %8 {offsets = [0, 8], sizes = [16, 8], strides = [1, 1]} : vector<16x32xf32> to vector<16x8xf32>
    %21 = vector.extract_strided_slice %8 {offsets = [0, 16], sizes = [16, 8], strides = [1, 1]} : vector<16x32xf32> to vector<16x8xf32>
    %22 = vector.extract_strided_slice %8 {offsets = [0, 24], sizes = [16, 8], strides = [1, 1]} : vector<16x32xf32> to vector<16x8xf32>
    %23 = tpu.concatenate %19, %20, %21, %22 in 0 : vector<16x8xf32>, vector<16x8xf32>, vector<16x8xf32>, vector<16x8xf32> -> vector<64x8xf32>
    %24 = arith.truncf %13 : vector<64x8xf32> to vector<64x8xbf16>
    %25 = arith.truncf %18 : vector<64x8xf32> to vector<64x8xbf16>
    "tpu.trace_start"() <{level = 10 : i32, message = "qd,kd->qk"}> : () -> ()
    %cst_3 = arith.constant dense<0.000000e+00> : vector<64x64xf32>
    %26 = tpu.matmul %24, %25, %cst_3 {dimension_numbers = #tpu.dot_dimension_numbers<[1], [1], [0], [0], [0, 0, 1, 0], [], []>} : vector<64x8xbf16>, vector<64x8xbf16>, vector<64x64xf32> -> vector<64x64xf32>
    "tpu.trace_stop"() : () -> ()
    %c0_4 = arith.constant 0 : index
    %c0_5 = arith.constant 0 : index
    %27 = vector.load %arg2[%c0_4, %c0_5] : memref<64x64xf32, #tpu.memory_space<vmem>>, vector<64x64xf32>
    %28 = arith.addf %26, %27 : vector<64x64xf32>
    %cst_6 = arith.constant dense<0xFF800000> : vector<64xf32>
    %29 = vector.multi_reduction <maximumf>, %28, %cst_6 [1] : vector<64x64xf32> to vector<64xf32>
    %30 = vector.shape_cast %29 : vector<64xf32> to vector<64x1xf32>
    %31 = vector.broadcast %30 : vector<64x1xf32> to vector<64x64xf32>
    %32 = arith.subf %28, %31 : vector<64x64xf32>
    %33 = math.exp %32 : vector<64x64xf32>
    %cst_7 = arith.constant dense<0.000000e+00> : vector<64xf32>
    %34 = vector.multi_reduction <add>, %33, %cst_7 [1] : vector<64x64xf32> to vector<64xf32>
    %35 = vector.shape_cast %34 : vector<64xf32> to vector<64x1xf32>
    %36 = tpu.reciprocal %35 {approx = true} : vector<64x1xf32> -> vector<64x1xf32>
    %37 = vector.broadcast %36 : vector<64x1xf32> to vector<64x64xf32>
    %38 = arith.mulf %33, %37 : vector<64x64xf32>
    %39 = arith.truncf %38 : vector<64x64xf32> to vector<64x64xbf16>
    %40 = arith.truncf %23 : vector<64x8xf32> to vector<64x8xbf16>
    %cst_8 = arith.constant dense<0.000000e+00> : vector<64x8xf32>
    %41 = tpu.matmul %39, %40, %cst_8 {dimension_numbers = #tpu.dot_dimension_numbers<[1], [0], [0], [1], [0, 0, 1, 1], [], []>} : vector<64x64xbf16>, vector<64x8xbf16>, vector<64x8xf32> -> vector<64x8xf32>
    %42 = vector.extract_strided_slice %41 {offsets = [0, 0], sizes = [16, 8], strides = [1, 1]} : vector<64x8xf32> to vector<16x8xf32>
    %43 = vector.extract_strided_slice %41 {offsets = [16, 0], sizes = [16, 8], strides = [1, 1]} : vector<64x8xf32> to vector<16x8xf32>
    %44 = vector.extract_strided_slice %41 {offsets = [32, 0], sizes = [16, 8], strides = [1, 1]} : vector<64x8xf32> to vector<16x8xf32>
    %45 = vector.extract_strided_slice %41 {offsets = [48, 0], sizes = [16, 8], strides = [1, 1]} : vector<64x8xf32> to vector<16x8xf32>
    %46 = tpu.concatenate %42, %43, %44, %45 in 1 : vector<16x8xf32>, vector<16x8xf32>, vector<16x8xf32>, vector<16x8xf32> -> vector<16x32xf32>
    %c0_9 = arith.constant 0 : index
    %c0_10 = arith.constant 0 : index
    %47 = vector.load %arg6[%c0_9, %c0_10] : memref<8x128xf32, #tpu.memory_space<vmem>>, vector<1x128xf32>
    %c1 = arith.constant 1 : index
    %c0_11 = arith.constant 0 : index
    %48 = vector.load %arg6[%c1, %c0_11] : memref<8x128xf32, #tpu.memory_space<vmem>>, vector<1x32xf32>
    %c1_12 = arith.constant 1 : index
    %c32 = arith.constant 32 : index
    %49 = vector.load %arg6[%c1_12, %c32] : memref<8x128xf32, #tpu.memory_space<vmem>>, vector<1x32xf32>
    %c1_13 = arith.constant 1 : index
    %c64 = arith.constant 64 : index
    %50 = vector.load %arg6[%c1_13, %c64] : memref<8x128xf32, #tpu.memory_space<vmem>>, vector<1x32xf32>
    %c1_14 = arith.constant 1 : index
    %c96 = arith.constant 96 : index
    %51 = vector.load %arg6[%c1_14, %c96] : memref<8x128xf32, #tpu.memory_space<vmem>>, vector<1x32xf32>
    %c2 = arith.constant 2 : index
    %c0_15 = arith.constant 0 : index
    %52 = vector.load %arg6[%c2, %c0_15] : memref<8x128xf32, #tpu.memory_space<vmem>>, vector<1x32xf32>
    %c2_16 = arith.constant 2 : index
    %c32_17 = arith.constant 32 : index
    %53 = vector.load %arg6[%c2_16, %c32_17] : memref<8x128xf32, #tpu.memory_space<vmem>>, vector<1x32xf32>
    %54 = vector.extract_strided_slice %2 {offsets = [0, 96], sizes = [32, 32], strides = [1, 1]} : vector<32x128xf32> to vector<32x32xf32>
    %55 = arith.truncf %46 : vector<16x32xf32> to vector<16x32xbf16>
    %56 = arith.truncf %54 : vector<32x32xf32> to vector<32x32xbf16>
    %cst_18 = arith.constant dense<0.000000e+00> : vector<16x32xf32>
    %57 = tpu.matmul %55, %56, %cst_18 {dimension_numbers = #tpu.dot_dimension_numbers<[1], [0], [0], [1], [0, 0, 1, 1], [], []>} : vector<16x32xbf16>, vector<32x32xbf16>, vector<16x32xf32> -> vector<16x32xf32>
    %58 = vector.broadcast %48 : vector<1x32xf32> to vector<16x32xf32>
    %59 = arith.addf %57, %58 : vector<16x32xf32>
    %60 = arith.addf %59, %1 : vector<16x32xf32>
    %cst_19 = arith.constant dense<0.000000e+00> : vector<16xf32>
    %61 = vector.multi_reduction <add>, %60, %cst_19 [1] : vector<16x32xf32> to vector<16xf32>
    %62 = vector.shape_cast %61 : vector<16xf32> to vector<16x1xf32>
    %cst_20 = arith.constant 3.200000e+01 : f32
    %63 = vector.broadcast %cst_20 : f32 to vector<16x1xf32>
    %64 = arith.divf %62, %63 : vector<16x1xf32>
    %65 = vector.broadcast %64 : vector<16x1xf32> to vector<16x32xf32>
    %66 = arith.subf %60, %65 : vector<16x32xf32>
    %67 = vector.broadcast %64 : vector<16x1xf32> to vector<16x32xf32>
    %68 = arith.subf %60, %67 : vector<16x32xf32>
    %69 = arith.mulf %66, %68 : vector<16x32xf32>
    %cst_21 = arith.constant dense<0.000000e+00> : vector<16xf32>
    %70 = vector.multi_reduction <add>, %69, %cst_21 [1] : vector<16x32xf32> to vector<16xf32>
    %71 = vector.shape_cast %70 : vector<16xf32> to vector<16x1xf32>
    %cst_22 = arith.constant 3.200000e+01 : f32
    %72 = vector.broadcast %cst_22 : f32 to vector<16x1xf32>
    %73 = arith.divf %71, %72 : vector<16x1xf32>
    %74 = vector.broadcast %64 : vector<16x1xf32> to vector<16x32xf32>
    %75 = arith.subf %60, %74 : vector<16x32xf32>
    %cst_23 = arith.constant 9.99999974E-6 : f32
    %76 = vector.broadcast %cst_23 : f32 to vector<16x1xf32>
    %77 = arith.addf %73, %76 : vector<16x1xf32>
    %78 = math.rsqrt %77 : vector<16x1xf32>
    %79 = vector.broadcast %78 : vector<16x1xf32> to vector<16x32xf32>
    %80 = arith.mulf %75, %79 : vector<16x32xf32>
    %81 = vector.broadcast %49 : vector<1x32xf32> to vector<16x32xf32>
    %82 = arith.mulf %80, %81 : vector<16x32xf32>
    %83 = vector.broadcast %50 : vector<1x32xf32> to vector<16x32xf32>
    %84 = arith.addf %82, %83 : vector<16x32xf32>
    %c0_24 = arith.constant 0 : index
    %c0_25 = arith.constant 0 : index
    %85 = vector.load %arg4[%c0_24, %c0_25] : memref<32x128xf32, #tpu.memory_space<vmem>>, vector<32x128xf32>
    %86 = arith.truncf %84 : vector<16x32xf32> to vector<16x32xbf16>
    %87 = arith.truncf %85 : vector<32x128xf32> to vector<32x128xbf16>
    %cst_26 = arith.constant dense<0.000000e+00> : vector<16x128xf32>
    %88 = tpu.matmul %86, %87, %cst_26 {dimension_numbers = #tpu.dot_dimension_numbers<[1], [0], [0], [1], [0, 0, 1, 1], [], []>} : vector<16x32xbf16>, vector<32x128xbf16>, vector<16x128xf32> -> vector<16x128xf32>
    %89 = vector.broadcast %47 : vector<1x128xf32> to vector<16x128xf32>
    %90 = arith.addf %88, %89 : vector<16x128xf32>
    %cst_27 = arith.constant 0.000000e+00 : f32
    %91 = vector.broadcast %cst_27 : f32 to vector<16x128xf32>
    %92 = arith.maximumf %90, %91 : vector<16x128xf32>
    %c0_28 = arith.constant 0 : index
    %c0_29 = arith.constant 0 : index
    %93 = vector.load %arg5[%c0_28, %c0_29] : memref<128x32xf32, #tpu.memory_space<vmem>>, vector<128x32xf32>
    %94 = arith.truncf %92 : vector<16x128xf32> to vector<16x128xbf16>
    %95 = arith.truncf %93 : vector<128x32xf32> to vector<128x32xbf16>
    %cst_30 = arith.constant dense<0.000000e+00> : vector<16x32xf32>
    %96 = tpu.matmul %94, %95, %cst_30 {dimension_numbers = #tpu.dot_dimension_numbers<[1], [0], [0], [1], [0, 0, 1, 1], [], []>} : vector<16x128xbf16>, vector<128x32xbf16>, vector<16x32xf32> -> vector<16x32xf32>
    %97 = vector.broadcast %53 : vector<1x32xf32> to vector<16x32xf32>
    %98 = arith.addf %96, %97 : vector<16x32xf32>
    %99 = arith.addf %98, %84 : vector<16x32xf32>
    %cst_31 = arith.constant dense<0.000000e+00> : vector<16xf32>
    %100 = vector.multi_reduction <add>, %99, %cst_31 [1] : vector<16x32xf32> to vector<16xf32>
    %101 = vector.shape_cast %100 : vector<16xf32> to vector<16x1xf32>
    %cst_32 = arith.constant 3.200000e+01 : f32
    %102 = vector.broadcast %cst_32 : f32 to vector<16x1xf32>
    %103 = arith.divf %101, %102 : vector<16x1xf32>
    %104 = vector.broadcast %103 : vector<16x1xf32> to vector<16x32xf32>
    %105 = arith.subf %99, %104 : vector<16x32xf32>
    %106 = vector.broadcast %103 : vector<16x1xf32> to vector<16x32xf32>
    %107 = arith.subf %99, %106 : vector<16x32xf32>
    %108 = arith.mulf %105, %107 : vector<16x32xf32>
    %cst_33 = arith.constant dense<0.000000e+00> : vector<16xf32>
    %109 = vector.multi_reduction <add>, %108, %cst_33 [1] : vector<16x32xf32> to vector<16xf32>
    %110 = vector.shape_cast %109 : vector<16xf32> to vector<16x1xf32>
    %cst_34 = arith.constant 3.200000e+01 : f32
    %111 = vector.broadcast %cst_34 : f32 to vector<16x1xf32>
    %112 = arith.divf %110, %111 : vector<16x1xf32>
    %113 = vector.broadcast %103 : vector<16x1xf32> to vector<16x32xf32>
    %114 = arith.subf %99, %113 : vector<16x32xf32>
    %cst_35 = arith.constant 9.99999974E-6 : f32
    %115 = vector.broadcast %cst_35 : f32 to vector<16x1xf32>
    %116 = arith.addf %112, %115 : vector<16x1xf32>
    %117 = math.rsqrt %116 : vector<16x1xf32>
    %118 = vector.broadcast %117 : vector<16x1xf32> to vector<16x32xf32>
    %119 = arith.mulf %114, %118 : vector<16x32xf32>
    %120 = vector.broadcast %51 : vector<1x32xf32> to vector<16x32xf32>
    %121 = arith.mulf %119, %120 : vector<16x32xf32>
    %122 = vector.broadcast %52 : vector<1x32xf32> to vector<16x32xf32>
    %123 = arith.addf %121, %122 : vector<16x32xf32>
    %c0_36 = arith.constant 0 : index
    %c0_37 = arith.constant 0 : index
    %124 = vector.load %arg7[%c0_36, %c0_37] : memref<16x32xf32, #tpu.memory_space<vmem>>, vector<16x32xf32>
    tpu.vector_store %arg7[%c0_36, %c0_37], %123 {strides = array<i32>} : memref<16x32xf32, #tpu.memory_space<vmem>>, vector<16x32xf32>,
    return
  }
  func.func @transform_0(%arg0: i32) -> (i32, i32) {
    %c0_i32 = arith.constant 0 : i32
    %c0_i32_0 = arith.constant 0 : i32
    %c0_i32_1 = arith.constant 0 : i32
    return %c0_i32, %c0_i32_0 : i32, i32
  }
  func.func @transform_1(%arg0: i32) -> (i32, i32) {
    %c0_i32 = arith.constant 0 : i32
    %c0_i32_0 = arith.constant 0 : i32
    %c0_i32_1 = arith.constant 0 : i32
    return %c0_i32, %c0_i32_0 : i32, i32
  }
  func.func @transform_2(%arg0: i32) -> (i32, i32) {
    %c0_i32 = arith.constant 0 : i32
    %c0_i32_0 = arith.constant 0 : i32
    %c0_i32_1 = arith.constant 0 : i32
    return %c0_i32, %c0_i32_0 : i32, i32
  }
  func.func @transform_3(%arg0: i32) -> (i32, i32) {
    %c0_i32 = arith.constant 0 : i32
    %c0_i32_0 = arith.constant 0 : i32
    %c0_i32_1 = arith.constant 0 : i32
    return %c0_i32, %c0_i32_0 : i32, i32
  }
  func.func @transform_4(%arg0: i32) -> (i32, i32) {
    %c0_i32 = arith.constant 0 : i32
    %c0_i32_0 = arith.constant 0 : i32
    %c0_i32_1 = arith.constant 0 : i32
    return %c0_i32, %c0_i32_0 : i32, i32
  }
  func.func @transform_5(%arg0: i32) -> (i32, i32) {
    %c0_i32 = arith.constant 0 : i32
    %c0_i32_0 = arith.constant 0 : i32
    %c0_i32_1 = arith.constant 0 : i32
    return %c0_i32, %c0_i32_0 : i32, i32
  }
  func.func @transform_6(%arg0: i32) -> (i32, i32) {
    %c0_i32 = arith.constant 0 : i32
    %c0_i32_0 = arith.constant 0 : i32
    %c0_i32_1 = arith.constant 0 : i32
    return %c0_i32, %c0_i32_0 : i32, i32
  }
}

</mosaic_0001>

<llo_original>
// kernel: transformer_block_forward.1
$region0: #{transformer_block_forward.1}
  #allocation0 [shape = 'u32[]', space=smem, size = 0x4, offset = 0x4, fixed_abs, tag = 'smem constant byte address 0x4 - core index']
  #allocation1 [shape = 'u32[144,128]{1,0:T(1,128)}', space=vmem, size = 0x12000, scoped, tag = 'internal scratch']
  %s0 = inlined_call_operand.vmem [shape: f32[48,32], index: 0, kind: input, shape index: {}]
  %s1 = inlined_call_operand.vmem [shape: f32[64,64], index: 1, kind: input, shape index: {}]
  %s2 = inlined_call_operand.vmem [shape: f32[32,128], index: 2, kind: input, shape index: {}]
  %s3 = inlined_call_operand.vmem [shape: f32[32,128], index: 3, kind: input, shape index: {}]
  %s4 = inlined_call_operand.vmem [shape: f32[128,32], index: 4, kind: input, shape index: {}]
  %s5 = inlined_call_operand.vmem [shape: f32[8,128], index: 5, kind: input, shape index: {}]
  %s6 = inlined_call_operand.hbm [shape: f32[16,32], index: 6, kind: output, shape index: {}]
  %s7 = sld [smem:[#allocation0]]
  $region34: #{transformer_block_forward.1} parent=0
    _
  %s9 = ssub.s32 1, %s7
  %s10 = scalar_select 0, %s9, %s7
  $region1: #{transformer_block_forward.1} parent=0
    #allocation2 [shape = 'u8[8192]{0}', space=vmem, size = 0x2000, scoped, tag = 'output window, operand 0, single buffered']
    #allocation3 [shape = 's32[1]{0}', space=sflag, size = 0x4, scoped, tag = 'scoped memory for transformer_block_forward.1']
    %11 = vsyncpa [#allocation3], 0
    // Predicated region
    $region2: #{transformer_block_forward.1} parent=1 // pred_check
      _
    $region3: #{transformer_block_forward.1} parent=1 // pred_check_branch
      %13 = sbr.rel (0) target = $region5
    $region4: #{transformer_block_forward.1} parent=1 // pred_region
      _
    $region5: #{transformer_block_forward.1} parent=1 // pred_fallthru
      _
    // Predicated region
    $region6: #{transformer_block_forward.1} parent=1 // pred_check
      _
    $region7: #{transformer_block_forward.1} parent=1 // pred_check_branch
      %15 = sbr.rel (0) target = $region9
    $region8: #{transformer_block_forward.1} parent=1 // pred_region
      _
    $region9: #{transformer_block_forward.1} parent=1 // pred_fallthru
      _
    // Predicated region
    $region10: #{transformer_block_forward.1} parent=1 // pred_check
      _
    $region11: #{transformer_block_forward.1} parent=1 // pred_check_branch
      %17 = sbr.rel (0) target = $region13
    $region12: #{transformer_block_forward.1} parent=1 // pred_region
      _
    $region13: #{transformer_block_forward.1} parent=1 // pred_fallthru
      _
    // Predicated region
    $region14: #{transformer_block_forward.1} parent=1 // pred_check
      _
    $region15: #{transformer_block_forward.1} parent=1 // pred_check_branch
      %19 = sbr.rel (0) target = $region17
    $region16: #{transformer_block_forward.1} parent=1 // pred_region
      _
    $region17: #{transformer_block_forward.1} parent=1 // pred_fallthru
      _
    // Predicated region
    $region18: #{transformer_block_forward.1} parent=1 // pred_check
      _
    $region19: #{transformer_block_forward.1} parent=1 // pred_check_branch
      %21 = sbr.rel (0) target = $region21
    $region20: #{transformer_block_forward.1} parent=1 // pred_region
      _
    $region21: #{transformer_block_forward.1} parent=1 // pred_fallthru
      _
    // Predicated region
    $region22: #{transformer_block_forward.1} parent=1 // pred_check
      _
    $region23: #{transformer_block_forward.1} parent=1 // pred_check_branch
      %23 = sbr.rel (0) target = $region25
    $region24: #{transformer_block_forward.1} parent=1 // pred_region
      _
    $region25: #{transformer_block_forward.1} parent=1 // pred_fallthru
      _
    %v25 = vld [vmem:[%s0] sm:$0xff]
    %v26 = vld [vmem:[%s0 + $0x8] sm:$0xff]
    %v27 = vld [vmem:[%s0 + $0x10] sm:$0xff]
    %v28 = vld [vmem:[%s0 + $0x18] sm:$0xff]
    %v29 = vld [vmem:[%s0 + $0x20] sm:$0xff]
    %v30 = vld [vmem:[%s0 + $0x28] sm:$0xff]
    %v31 = vld [vmem:[%s2] sm:$0xff]
    %v32 = vld [vmem:[%s2 + $0x8] sm:$0xff]
    %v33 = vld [vmem:[%s2 + $0x10] sm:$0xff]
    %v34 = vld [vmem:[%s2 + $0x18] sm:$0xff]
    %v35 = vpack.c.bf16 %v26, %v25
    %v36 = vpack.c.bf16 %v28, %v27
    %v37 = vpack.c.bf16 %v30, %v29
    %v38 = vpack.c.bf16 %v32, %v31
    %v39 = vpack.c.bf16 %v34, %v33
    %vm40 = vcmask 261120
    %v42 = vsel %vm40, %v35, 0
    %v45 = vsel %vm40, %v36, 0
    %v48 = vsel %vm40, %v37, 0
    %50 = vmatprep.subr.bf16.mxu0 0
    %51 = vmatpush1.bf16.msra.mxu0 0
    %52 = vmatprep.subr.bf16.mxu0 0
    %53 = vmatpush1.bf16.msra.mxu0 0
    %54 = vmatprep.subr.bf16.mxu0 0
    %55 = vmatpush1.bf16.msra.mxu0 0
    %56 = vmatprep.subr.bf16.mxu0 0
    %57 = vmatpush1.bf16.msra.mxu0 0
    %58 = vmatprep.subr.bf16.mxu0 0
    %59 = vmatpush1.bf16.msra.mxu0 0
    %60 = vmatprep.subr.bf16.mxu0 0
    %61 = vmatpush1.bf16.msra.mxu0 0
    %62 = vmatprep.subr.bf16.mxu0 0
    %63 = vmatpush1.bf16.msra.mxu0 %v39
    %64 = vmatprep.subr.bf16.mxu0 0
    %65 = vmatpush1.bf16.msra.mxu0 %v38
    %66 = vmatprep.subr.bf16.mxu0 0
    %67 = vmatpush2.bf16.msra.mxu0 0
    %68 = vmatprep.subr.bf16.mxu0 0
    %69 = vmatpush2.bf16.msra.mxu0 0
    %70 = vmatprep.subr.bf16.mxu0 0
    %71 = vmatpush2.bf16.msra.mxu0 0
    %72 = vmatprep.subr.bf16.mxu0 0
    %73 = vmatpush2.bf16.msra.mxu0 0
    %74 = vmatprep.subr.bf16.mxu0 0
    %75 = vmatpush2.bf16.msra.mxu0 0
    %76 = vmatprep.subr.bf16.mxu0 0
    %77 = vmatpush2.bf16.msra.mxu0 0
    %78 = vmatprep.subr.bf16.mxu0 0
    %79 = vmatpush2.bf16.msra.mxu0 0
    %80 = vmatprep.subr.bf16.mxu0 0
    %81 = vmatpush2.bf16.msra.mxu0 0
    %82 = vmatprep.mubr.bf16.mxu0 0
    %83 = vmatmul.mubr.bf16.gmra.mxu0 %v42
    %v84 = vpop.f32.mrf.mxu0
    %v85 = vadd.f32 0.0, %v84
    %v86 = vpop.f32.mrf.mxu0
    %v87 = vpop.f32.mrf.mxu0
    %v88 = vadd.f32 0.0, %v87
    %v89 = vpop.f32.mrf.mxu0
    %90 = vmatprep.mubr.bf16.mxu0 0
    %91 = vmatmul.mubr.bf16.gmra.mxu0 %v45
    %v92 = vpop.f32.mrf.mxu0
    %v93 = vadd.f32 0.0, %v92
    %v94 = vpop.f32.mrf.mxu0
    %v95 = vpop.f32.mrf.mxu0
    %v96 = vadd.f32 0.0, %v95
    %v97 = vpop.f32.mrf.mxu0
    %98 = vmatprep.mubr.bf16.mxu0 0
    %99 = vmatmul.mubr.bf16.gmra.mxu0 %v48
    %v100 = vpop.f32.mrf.mxu0
    %v101 = vadd.f32 0.0, %v100
    %v102 = vpop.f32.mrf.mxu0
    %v103 = vpop.f32.mrf.mxu0
    %v104 = vadd.f32 0.0, %v103
    %v105 = vpop.f32.mrf.mxu0
    %106 = vdwg.mxu0
    %109 = vrot.lane.b32.xlu0 %v85, 120
    %v110 = vpop.permute.xlu0 %109
    %111 = vrot.lane.b32.xlu0 %v88, 120
    %v112 = vpop.permute.xlu0 %111
    %115 = vrot.lane.b32.xlu0 %v85, 112
    %v116 = vpop.permute.xlu0 %115
    %117 = vrot.lane.b32.xlu0 %v88, 112
    %v118 = vpop.permute.xlu0 %117
    %121 = vrot.lane.b32.xlu0 %v85, 104
    %v122 = vpop.permute.xlu0 %121
    %123 = vrot.lane.b32.xlu0 %v88, 104
    %v124 = vpop.permute.xlu0 %123
    %129 = vrot.lane.b32.xlu0 %v93, 120
    %v130 = vpop.permute.xlu0 %129
    %131 = vrot.lane.b32.xlu0 %v96, 120
    %v132 = vpop.permute.xlu0 %131
    %135 = vrot.lane.b32.xlu0 %v93, 112
    %v136 = vpop.permute.xlu0 %135
    %137 = vrot.lane.b32.xlu0 %v96, 112
    %v138 = vpop.permute.xlu0 %137
    %141 = vrot.lane.b32.xlu0 %v93, 104
    %v142 = vpop.permute.xlu0 %141
    %143 = vrot.lane.b32.xlu0 %v96, 104
    %v144 = vpop.permute.xlu0 %143
    %149 = vrot.lane.b32.xlu0 %v101, 120
    %v150 = vpop.permute.xlu0 %149
    %151 = vrot.lane.b32.xlu0 %v104, 120
    %v152 = vpop.permute.xlu0 %151
    %155 = vrot.lane.b32.xlu0 %v101, 112
    %v156 = vpop.permute.xlu0 %155
    %157 = vrot.lane.b32.xlu0 %v104, 112
    %v158 = vpop.permute.xlu0 %157
    %161 = vrot.lane.b32.xlu0 %v101, 104
    %v162 = vpop.permute.xlu0 %161
    %163 = vrot.lane.b32.xlu0 %v104, 104
    %v164 = vpop.permute.xlu0 %163
    %v167 = vpack.c.bf16 %v88, %v85
    %v168 = vpack.c.bf16 %v112, %v110
    %v169 = vpack.c.bf16 %v118, %v116
    %v170 = vpack.c.bf16 %v124, %v122
    %v171 = vpack.c.bf16 %v96, %v93
    %v172 = vpack.c.bf16 %v132, %v130
    %v173 = vpack.c.bf16 %v138, %v136
    %v174 = vpack.c.bf16 %v144, %v142
    %v175 = vld [vmem:[%s1] sm:$0xff]
    %v176 = vld [vmem:[%s1 + $0x8] sm:$0xff]
    %v177 = vld [vmem:[%s1 + $0x10] sm:$0xff]
    %v178 = vld [vmem:[%s1 + $0x18] sm:$0xff]
    %v179 = vld [vmem:[%s1 + $0x20] sm:$0xff]
    %v180 = vld [vmem:[%s1 + $0x28] sm:$0xff]
    %v181 = vld [vmem:[%s1 + $0x30] sm:$0xff]
    %v182 = vld [vmem:[%s1 + $0x38] sm:$0xff]
    %187 = vrot.lane.b32.xlu0 %v171, 96
    %v188 = vpop.permute.xlu0 %187
    %189 = vrot.lane.b32.xlu0 %v172, 96
    %v190 = vpop.permute.xlu0 %189
    %191 = vrot.lane.b32.xlu0 %v173, 96
    %v192 = vpop.permute.xlu0 %191
    %193 = vrot.lane.b32.xlu0 %v174, 96
    %v194 = vpop.permute.xlu0 %193
    %vm195 = vcmask 64512
    %v197 = vsel %vm195, %v167, 0
    %v200 = vsel %vm195, %v168, 0
    %v203 = vsel %vm195, %v169, 0
    %v206 = vsel %vm195, %v170, 0
    %v209 = vsel %vm195, %v188, 0
    %v212 = vsel %vm195, %v190, 0
    %v215 = vsel %vm195, %v192, 0
    %v218 = vsel %vm195, %v194, 0
    %220 = vmatprep.subr.bf16.mxu0 0
    %221 = vmatpush1.bf16.xpose.msra.mxu0 0
    %222 = vmatprep.subr.bf16.mxu0 0
    %223 = vmatpush1.bf16.xpose.msra.mxu0 0
    %224 = vmatprep.subr.bf16.mxu0 0
    %225 = vmatpush1.bf16.xpose.msra.mxu0 0
    %226 = vmatprep.subr.bf16.mxu0 0
    %227 = vmatpush1.bf16.xpose.msra.mxu0 0
    %228 = vmatprep.subr.bf16.mxu0 0
    %229 = vmatpush1.bf16.xpose.msra.mxu0 %v218
    %230 = vmatprep.subr.bf16.mxu0 0
    %231 = vmatpush1.bf16.xpose.msra.mxu0 %v215
    %232 = vmatprep.subr.bf16.mxu0 0
    %233 = vmatpush1.bf16.xpose.msra.mxu0 %v212
    %234 = vmatprep.subr.bf16.mxu0 0
    %235 = vmatpush1.bf16.xpose.msra.mxu0 %v209
    %236 = vmatprep.subr.bf16.mxu0 0
    %237 = vmatpush2.bf16.xpose.msra.mxu0 0
    %238 = vmatprep.subr.bf16.mxu0 0
    %239 = vmatpush2.bf16.xpose.msra.mxu0 0
    %240 = vmatprep.subr.bf16.mxu0 0
    %241 = vmatpush2.bf16.xpose.msra.mxu0 0
    %242 = vmatprep.subr.bf16.mxu0 0
    %243 = vmatpush2.bf16.xpose.msra.mxu0 0
    %244 = vmatprep.subr.bf16.mxu0 0
    %245 = vmatpush2.bf16.xpose.msra.mxu0 0
    %246 = vmatprep.subr.bf16.mxu0 0
    %247 = vmatpush2.bf16.xpose.msra.mxu0 0
    %248 = vmatprep.subr.bf16.mxu0 0
    %249 = vmatpush2.bf16.xpose.msra.mxu0 0
    %250 = vmatprep.subr.bf16.mxu0 0
    %251 = vmatpush2.bf16.xpose.msra.mxu0 0
    %252 = vmatprep.mubr.bf16.mxu0 0
    %253 = vmatmul.mubr.bf16.gmra.mxu0 %v197
    %v254 = vpop.f32.mrf.mxu0
    %v255 = vadd.f32 %v175, %v254
    %v256 = vpop.f32.mrf.mxu0
    %v257 = vpop.f32.mrf.mxu0
    %v258 = vadd.f32 %v176, %v257
    %v259 = vpop.f32.mrf.mxu0
    %260 = vmatprep.mubr.bf16.mxu0 0
    %261 = vmatmul.mubr.bf16.gmra.mxu0 %v200
    %v262 = vpop.f32.mrf.mxu0
    %v263 = vadd.f32 %v177, %v262
    %v264 = vpop.f32.mrf.mxu0
    %v265 = vpop.f32.mrf.mxu0
    %v266 = vadd.f32 %v178, %v265
    %v267 = vpop.f32.mrf.mxu0
    %268 = vmatprep.mubr.bf16.mxu0 0
    %269 = vmatmul.mubr.bf16.gmra.mxu0 %v203
    %v270 = vpop.f32.mrf.mxu0
    %v271 = vadd.f32 %v179, %v270
    %v272 = vpop.f32.mrf.mxu0
    %v273 = vpop.f32.mrf.mxu0
    %v274 = vadd.f32 %v180, %v273
    %v275 = vpop.f32.mrf.mxu0
    %276 = vmatprep.mubr.bf16.mxu0 0
    %277 = vmatmul.mubr.bf16.gmra.mxu0 %v206
    %v278 = vpop.f32.mrf.mxu0
    %v279 = vadd.f32 %v181, %v278
    %v280 = vpop.f32.mrf.mxu0
    %v281 = vpop.f32.mrf.mxu0
    %v282 = vadd.f32 %v182, %v281
    %v283 = vpop.f32.mrf.mxu0
    %284 = vdwg.mxu0
    %vm285 = vcmask 523264
    %v286 = vsel %vm285, %v255, -inf
    %287 = vmax.xlane.f32.xlu0 %v286
    %v288 = vpop.xlane.xlu0 %287
    %v289 = vsel %vm285, %v258, -inf
    %290 = vmax.xlane.f32.xlu0 %v289
    %v291 = vpop.xlane.xlu0 %290
    %v292 = vsel %vm285, %v263, -inf
    %293 = vmax.xlane.f32.xlu0 %v292
    %v294 = vpop.xlane.xlu0 %293
    %v295 = vsel %vm285, %v266, -inf
    %296 = vmax.xlane.f32.xlu0 %v295
    %v297 = vpop.xlane.xlu0 %296
    %v298 = vsel %vm285, %v271, -inf
    %299 = vmax.xlane.f32.xlu0 %v298
    %v300 = vpop.xlane.xlu0 %299
    %v301 = vsel %vm285, %v274, -inf
    %302 = vmax.xlane.f32.xlu0 %v301
    %v303 = vpop.xlane.xlu0 %302
    %v304 = vsel %vm285, %v279, -inf
    %305 = vmax.xlane.f32.xlu0 %v304
    %v306 = vpop.xlane.xlu0 %305
    %v307 = vsel %vm285, %v282, -inf
    %308 = vmax.xlane.f32.xlu0 %v307
    %v309 = vpop.xlane.xlu0 %308
    %v310 = vsub.f32 %v255, %v288
    %v311 = vsub.f32 %v258, %v291
    %v312 = vsub.f32 %v263, %v294
    %v313 = vsub.f32 %v266, %v297
    %v314 = vsub.f32 %v271, %v300
    %v315 = vsub.f32 %v274, %v303
    %v316 = vsub.f32 %v279, %v306
    %v317 = vsub.f32 %v282, %v309
    %v318 = vmul.f32 %v310, 1.442695
    %v319 = vpow.pop %v318
    %v320 = vmul.f32 %v311, 1.442695
    %v321 = vpow.pop %v320
    %v322 = vmul.f32 %v312, 1.442695
    %v323 = vpow.pop %v322
    %v324 = vmul.f32 %v313, 1.442695
    %v325 = vpow.pop %v324
    %v326 = vmul.f32 %v314, 1.442695
    %v327 = vpow.pop %v326
    %v328 = vmul.f32 %v315, 1.442695
    %v329 = vpow.pop %v328
    %v330 = vmul.f32 %v316, 1.442695
    %v331 = vpow.pop %v330
    %v332 = vmul.f32 %v317, 1.442695
    %v333 = vpow.pop %v332
    %v334 = vsel %vm285, %v319, 0.0
    %335 = vadd.xlane.f32.xlu0 %v334
    %v336 = vpop.xlane.xlu0 %335
    %v337 = vsel %vm285, %v321, 0.0
    %338 = vadd.xlane.f32.xlu0 %v337
    %v339 = vpop.xlane.xlu0 %338
    %v340 = vsel %vm285, %v323, 0.0
    %341 = vadd.xlane.f32.xlu0 %v340
    %v342 = vpop.xlane.xlu0 %341
    %v343 = vsel %vm285, %v325, 0.0
    %344 = vadd.xlane.f32.xlu0 %v343
    %v345 = vpop.xlane.xlu0 %344
    %v346 = vsel %vm285, %v327, 0.0
    %347 = vadd.xlane.f32.xlu0 %v346
    %v348 = vpop.xlane.xlu0 %347
    %v349 = vsel %vm285, %v329, 0.0
    %350 = vadd.xlane.f32.xlu0 %v349
    %v351 = vpop.xlane.xlu0 %350
    %v352 = vsel %vm285, %v331, 0.0
    %353 = vadd.xlane.f32.xlu0 %v352
    %v354 = vpop.xlane.xlu0 %353
    %v355 = vsel %vm285, %v333, 0.0
    %356 = vadd.xlane.f32.xlu0 %v355
    %v357 = vpop.xlane.xlu0 %356
    %v358 = vrcp.pop %v336
    %v359 = vrcp.pop %v339
    %v360 = vrcp.pop %v342
    %v361 = vrcp.pop %v345
    %v362 = vrcp.pop %v348
    %v363 = vrcp.pop %v351
    %v364 = vrcp.pop %v354
    %v365 = vrcp.pop %v357
    %v366 = vmul.f32 %v319, %v358
    %v367 = vmul.f32 %v321, %v359
    %v368 = vmul.f32 %v323, %v360
    %v369 = vmul.f32 %v325, %v361
    %v370 = vmul.f32 %v327, %v362
    %v371 = vmul.f32 %v329, %v363
    %v372 = vmul.f32 %v331, %v364
    %v373 = vmul.f32 %v333, %v365
    %v374 = vpack.c.bf16 %v367, %v366
    %v375 = vpack.c.bf16 %v369, %v368
    %v376 = vpack.c.bf16 %v371, %v370
    %v377 = vpack.c.bf16 %v373, %v372
    %v378 = vpack.c.bf16 %v104, %v101
    %v379 = vpack.c.bf16 %v152, %v150
    %v380 = vpack.c.bf16 %v158, %v156
    %v381 = vpack.c.bf16 %v164, %v162
    %386 = vrot.lane.b32.xlu0 %v378, 64
    %v387 = vpop.permute.xlu0 %386
    %388 = vrot.lane.b32.xlu0 %v379, 64
    %v389 = vpop.permute.xlu0 %388
    %390 = vrot.lane.b32.xlu0 %v380, 64
    %v391 = vpop.permute.xlu0 %390
    %392 = vrot.lane.b32.xlu0 %v381, 64
    %v393 = vpop.permute.xlu0 %392
    %v399 = vsel %vm285, %v374, 0
    %v402 = vsel %vm285, %v375, 0
    %v405 = vsel %vm285, %v376, 0
    %v408 = vsel %vm285, %v377, 0
    %410 = vmatprep.subr.bf16.mxu0 0
    %411 = vmatpush1.bf16.msra.mxu0 0
    %412 = vmatprep.subr.bf16.mxu0 0
    %413 = vmatpush1.bf16.msra.mxu0 0
    %414 = vmatprep.subr.bf16.mxu0 0
    %415 = vmatpush1.bf16.msra.mxu0 0
    %416 = vmatprep.subr.bf16.mxu0 0
    %417 = vmatpush1.bf16.msra.mxu0 0
    %418 = vmatprep.subr.bf16.mxu0 0
    %419 = vmatpush1.bf16.msra.mxu0 %v393
    %420 = vmatprep.subr.bf16.mxu0 0
    %421 = vmatpush1.bf16.msra.mxu0 %v391
    %422 = vmatprep.subr.bf16.mxu0 0
    %423 = vmatpush1.bf16.msra.mxu0 %v389
    %424 = vmatprep.subr.bf16.mxu0 0
    %425 = vmatpush1.bf16.msra.mxu0 %v387
    %426 = vmatprep.subr.bf16.mxu0 0
    %427 = vmatpush2.bf16.msra.mxu0 0
    %428 = vmatprep.subr.bf16.mxu0 0
    %429 = vmatpush2.bf16.msra.mxu0 0
    %430 = vmatprep.subr.bf16.mxu0 0
    %431 = vmatpush2.bf16.msra.mxu0 0
    %432 = vmatprep.subr.bf16.mxu0 0
    %433 = vmatpush2.bf16.msra.mxu0 0
    %434 = vmatprep.subr.bf16.mxu0 0
    %435 = vmatpush2.bf16.msra.mxu0 0
    %436 = vmatprep.subr.bf16.mxu0 0
    %437 = vmatpush2.bf16.msra.mxu0 0
    %438 = vmatprep.subr.bf16.mxu0 0
    %439 = vmatpush2.bf16.msra.mxu0 0
    %440 = vmatprep.subr.bf16.mxu0 0
    %441 = vmatpush2.bf16.msra.mxu0 0
    %442 = vmatprep.mubr.bf16.mxu0 0
    %443 = vmatmul.mubr.bf16.gmra.mxu0 %v399
    %v444 = vpop.f32.mrf.mxu0
    %v445 = vadd.f32 0.0, %v444
    %v446 = vpop.f32.mrf.mxu0
    %v447 = vpop.f32.mrf.mxu0
    %v448 = vadd.f32 0.0, %v447
    %v449 = vpop.f32.mrf.mxu0
    %450 = vmatprep.mubr.bf16.mxu0 0
    %451 = vmatmul.mubr.bf16.gmra.mxu0 %v402
    %v452 = vpop.f32.mrf.mxu0
    %v453 = vadd.f32 0.0, %v452
    %v454 = vpop.f32.mrf.mxu0
    %v455 = vpop.f32.mrf.mxu0
    %v456 = vadd.f32 0.0, %v455
    %v457 = vpop.f32.mrf.mxu0
    %458 = vmatprep.mubr.bf16.mxu0 0
    %459 = vmatmul.mubr.bf16.gmra.mxu0 %v405
    %v460 = vpop.f32.mrf.mxu0
    %v461 = vadd.f32 0.0, %v460
    %v462 = vpop.f32.mrf.mxu0
    %v463 = vpop.f32.mrf.mxu0
    %v464 = vadd.f32 0.0, %v463
    %v465 = vpop.f32.mrf.mxu0
    %466 = vmatprep.mubr.bf16.mxu0 0
    %467 = vmatmul.mubr.bf16.gmra.mxu0 %v408
    %v468 = vpop.f32.mrf.mxu0
    %v469 = vadd.f32 0.0, %v468
    %v470 = vpop.f32.mrf.mxu0
    %v471 = vpop.f32.mrf.mxu0
    %v472 = vadd.f32 0.0, %v471
    %v473 = vpop.f32.mrf.mxu0
    %474 = vdwg.mxu0
    %477 = vrot.lane.b32.xlu0 %v453, 8
    %v478 = vpop.permute.xlu0 %477
    %479 = vrot.lane.b32.xlu0 %v456, 8
    %v480 = vpop.permute.xlu0 %479
    %485 = vrot.lane.b32.xlu0 %v461, 16
    %v486 = vpop.permute.xlu0 %485
    %487 = vrot.lane.b32.xlu0 %v464, 16
    %v488 = vpop.permute.xlu0 %487
    %493 = vrot.lane.b32.xlu0 %v469, 24
    %v494 = vpop.permute.xlu0 %493
    %495 = vrot.lane.b32.xlu0 %v472, 24
    %v496 = vpop.permute.xlu0 %495
    %v499 = vsel %vm195, %v445, %v478
    %v500 = vsel %vm195, %v448, %v480
    %vm501 = vcmask 130048
    %v502 = vsel %vm501, %v499, %v486
    %v503 = vsel %vm501, %v500, %v488
    %vm504 = vcmask 195584
    %v505 = vsel %vm504, %v502, %v494
    %v506 = vsel %vm504, %v503, %v496
    %v507 = vld [vmem:[%s5] sm:$0x1]
    %v508 = vld [vmem:[%s5 + $0x1] sm:$0x1]
    %v509 = vld [vmem:[%s5 + $0x2] sm:$0x1]
    %v510 = vpack.c.bf16 %v506, %v505
    %v511 = vlaneseq
    %v512 = vshrl.u32 %v511, 7
    %v513 = vsub.s32 0, %v512
    %v514 = vrot.slane %v508, %v513
    %517 = vrot.lane.b32.xlu0 %v38, 32
    %v518 = vpop.permute.xlu0 %517
    %519 = vrot.lane.b32.xlu0 %v39, 32
    %v520 = vpop.permute.xlu0 %519
    %v524 = vsel %vm40, %v510, 0
    %526 = vmatprep.subr.bf16.mxu0 0
    %527 = vmatpush1.bf16.msra.mxu0 0
    %528 = vmatprep.subr.bf16.mxu0 0
    %529 = vmatpush1.bf16.msra.mxu0 0
    %530 = vmatprep.subr.bf16.mxu0 0
    %531 = vmatpush1.bf16.msra.mxu0 0
    %532 = vmatprep.subr.bf16.mxu0 0
    %533 = vmatpush1.bf16.msra.mxu0 0
    %534 = vmatprep.subr.bf16.mxu0 0
    %535 = vmatpush1.bf16.msra.mxu0 0
    %536 = vmatprep.subr.bf16.mxu0 0
    %537 = vmatpush1.bf16.msra.mxu0 0
    %538 = vmatprep.subr.bf16.mxu0 0
    %539 = vmatpush1.bf16.msra.mxu0 %v520
    %540 = vmatprep.subr.bf16.mxu0 0
    %541 = vmatpush1.bf16.msra.mxu0 %v518
    %542 = vmatprep.subr.bf16.mxu0 0
    %543 = vmatpush2.bf16.msra.mxu0 0
    %544 = vmatprep.subr.bf16.mxu0 0
    %545 = vmatpush2.bf16.msra.mxu0 0
    %546 = vmatprep.subr.bf16.mxu0 0
    %547 = vmatpush2.bf16.msra.mxu0 0
    %548 = vmatprep.subr.bf16.mxu0 0
    %549 = vmatpush2.bf16.msra.mxu0 0
    %550 = vmatprep.subr.bf16.mxu0 0
    %551 = vmatpush2.bf16.msra.mxu0 0
    %552 = vmatprep.subr.bf16.mxu0 0
    %553 = vmatpush2.bf16.msra.mxu0 0
    %554 = vmatprep.subr.bf16.mxu0 0
    %555 = vmatpush2.bf16.msra.mxu0 0
    %556 = vmatprep.subr.bf16.mxu0 0
    %557 = vmatpush2.bf16.msra.mxu0 0
    %558 = vmatprep.mubr.bf16.mxu0 0
    %559 = vmatmul.mubr.bf16.gmra.mxu0 %v524
    %v560 = vpop.f32.mrf.mxu0
    %v561 = vadd.f32 %v514, %v560
    %v562 = vpop.f32.mrf.mxu0
    %v563 = vpop.f32.mrf.mxu0
    %v564 = vadd.f32 %v514, %v563
    %v565 = vpop.f32.mrf.mxu0
    %566 = vdwg.mxu0
    %v567 = vadd.f32 %v561, %v25
    %v568 = vadd.f32 %v564, %v26
    %v569 = vsel %vm40, %v567, 0.0
    %570 = vadd.xlane.f32.xlu0 %v569
    %v571 = vpop.xlane.xlu0 %570
    %v572 = vsel %vm40, %v568, 0.0
    %573 = vadd.xlane.f32.xlu0 %v572
    %v574 = vpop.xlane.xlu0 %573
    %v575 = vrcp.pop 32.0
    %v576 = vmul.f32 %v571, %v575
    %v577 = vmul.f32 %v574, %v575
    %v578 = vsub.f32 %v567, %v576
    %v579 = vsub.f32 %v568, %v577
    %v580 = vmul.f32 %v578, %v578
    %v581 = vmul.f32 %v579, %v579
    %v582 = vsel %vm40, %v580, 0.0
    %583 = vadd.xlane.f32.xlu0 %v582
    %v584 = vpop.xlane.xlu0 %583
    %v585 = vsel %vm40, %v581, 0.0
    %586 = vadd.xlane.f32.xlu0 %v585
    %v587 = vpop.xlane.xlu0 %586
    %v588 = vmul.f32 %v584, %v575
    %v589 = vmul.f32 %v587, %v575
    %v590 = vadd.f32 %v588, 1e-05
    %v591 = vadd.f32 %v589, 1e-05
    %v592 = vrsqrt.pop %v590
    %v593 = vrsqrt.pop %v591
    %v594 = vmul.f32 %v578, %v592
    %v595 = vmul.f32 %v579, %v593
    %597 = vrot.lane.b32.xlu0 %v514, 96
    %v598 = vpop.permute.xlu0 %597
    %v600 = vmul.f32 %v594, %v598
    %v601 = vmul.f32 %v595, %v598
    %602 = vrot.lane.b32.xlu0 %v514, 64
    %v603 = vpop.permute.xlu0 %602
    %v605 = vadd.f32 %v600, %v603
    %v606 = vadd.f32 %v601, %v603
    %v607 = vld [vmem:[%s3] sm:$0xff]
    %v608 = vld [vmem:[%s3 + $0x8] sm:$0xff]
    %v609 = vld [vmem:[%s3 + $0x10] sm:$0xff]
    %v610 = vld [vmem:[%s3 + $0x18] sm:$0xff]
    %v611 = vpack.c.bf16 %v606, %v605
    %v612 = vpack.c.bf16 %v608, %v607
    %v613 = vpack.c.bf16 %v610, %v609
    %v614 = vlaneseq
    %v615 = vshrl.u32 %v614, 7
    %v616 = vsub.s32 0, %v615
    %v617 = vrot.slane %v507, %v616
    %v619 = vsel %vm40, %v611, 0
    %621 = vmatprep.subr.bf16.mxu0 0
    %622 = vmatpush1.bf16.msra.mxu0 0
    %623 = vmatprep.subr.bf16.mxu0 0
    %624 = vmatpush1.bf16.msra.mxu0 0
    %625 = vmatprep.subr.bf16.mxu0 0
    %626 = vmatpush1.bf16.msra.mxu0 0
    %627 = vmatprep.subr.bf16.mxu0 0
    %628 = vmatpush1.bf16.msra.mxu0 0
    %629 = vmatprep.subr.bf16.mxu0 0
    %630 = vmatpush1.bf16.msra.mxu0 0
    %631 = vmatprep.subr.bf16.mxu0 0
    %632 = vmatpush1.bf16.msra.mxu0 0
    %633 = vmatprep.subr.bf16.mxu0 0
    %634 = vmatpush1.bf16.msra.mxu0 %v613
    %635 = vmatprep.subr.bf16.mxu0 0
    %636 = vmatpush1.bf16.msra.mxu0 %v612
    %637 = vmatprep.subr.bf16.mxu0 0
    %638 = vmatpush2.bf16.msra.mxu0 0
    %639 = vmatprep.subr.bf16.mxu0 0
    %640 = vmatpush2.bf16.msra.mxu0 0
    %641 = vmatprep.subr.bf16.mxu0 0
    %642 = vmatpush2.bf16.msra.mxu0 0
    %643 = vmatprep.subr.bf16.mxu0 0
    %644 = vmatpush2.bf16.msra.mxu0 0
    %645 = vmatprep.subr.bf16.mxu0 0
    %646 = vmatpush2.bf16.msra.mxu0 0
    %647 = vmatprep.subr.bf16.mxu0 0
    %648 = vmatpush2.bf16.msra.mxu0 0
    %649 = vmatprep.subr.bf16.mxu0 0
    %650 = vmatpush2.bf16.msra.mxu0 0
    %651 = vmatprep.subr.bf16.mxu0 0
    %652 = vmatpush2.bf16.msra.mxu0 0
    %653 = vmatprep.mubr.bf16.mxu0 0
    %654 = vmatmul.mubr.bf16.gmra.mxu0 %v619
    %v655 = vpop.f32.mrf.mxu0
    %v656 = vadd.f32 %v617, %v655
    %v657 = vpop.f32.mrf.mxu0
    %v658 = vpop.f32.mrf.mxu0
    %v659 = vadd.f32 %v617, %v658
    %v660 = vpop.f32.mrf.mxu0
    %661 = vdwg.mxu0
    %v662 = vmax.f32 %v656, 0.0
    %v663 = vmax.f32 %v659, 0.0
    %v664 = vld [vmem:[%s4] sm:$0xff]
    %v665 = vld [vmem:[%s4 + $0x8] sm:$0xff]
    %v666 = vld [vmem:[%s4 + $0x10] sm:$0xff]
    %v667 = vld [vmem:[%s4 + $0x18] sm:$0xff]
    %v668 = vld [vmem:[%s4 + $0x20] sm:$0xff]
    %v669 = vld [vmem:[%s4 + $0x28] sm:$0xff]
    %v670 = vld [vmem:[%s4 + $0x30] sm:$0xff]
    %v671 = vld [vmem:[%s4 + $0x38] sm:$0xff]
    %v672 = vld [vmem:[%s4 + $0x40] sm:$0xff]
    %v673 = vld [vmem:[%s4 + $0x48] sm:$0xff]
    %v674 = vld [vmem:[%s4 + $0x50] sm:$0xff]
    %v675 = vld [vmem:[%s4 + $0x58] sm:$0xff]
    %v676 = vld [vmem:[%s4 + $0x60] sm:$0xff]
    %v677 = vld [vmem:[%s4 + $0x68] sm:$0xff]
    %v678 = vld [vmem:[%s4 + $0x70] sm:$0xff]
    %v679 = vld [vmem:[%s4 + $0x78] sm:$0xff]
    %v680 = vpack.c.bf16 %v663, %v662
    %v681 = vpack.c.bf16 %v665, %v664
    %v682 = vpack.c.bf16 %v667, %v666
    %v683 = vpack.c.bf16 %v669, %v668
    %v684 = vpack.c.bf16 %v671, %v670
    %v685 = vpack.c.bf16 %v673, %v672
    %v686 = vpack.c.bf16 %v675, %v674
    %v687 = vpack.c.bf16 %v677, %v676
    %v688 = vpack.c.bf16 %v679, %v678
    %v689 = vlaneseq
    %v690 = vshrl.u32 %v689, 7
    %v691 = vsub.s32 0, %v690
    %v692 = vrot.slane %v509, %v691
    %694 = vrot.lane.b32.xlu0 %v692, 96
    %v695 = vpop.permute.xlu0 %694
    %697 = vmatprep.subr.bf16.mxu0 0
    %698 = vmatpush1.bf16.msra.mxu0 %v688
    %699 = vmatprep.subr.bf16.mxu0 0
    %700 = vmatpush1.bf16.msra.mxu0 %v687
    %701 = vmatprep.subr.bf16.mxu0 0
    %702 = vmatpush1.bf16.msra.mxu0 %v686
    %703 = vmatprep.subr.bf16.mxu0 0
    %704 = vmatpush1.bf16.msra.mxu0 %v685
    %705 = vmatprep.subr.bf16.mxu0 0
    %706 = vmatpush1.bf16.msra.mxu0 %v684
    %707 = vmatprep.subr.bf16.mxu0 0
    %708 = vmatpush1.bf16.msra.mxu0 %v683
    %709 = vmatprep.subr.bf16.mxu0 0
    %710 = vmatpush1.bf16.msra.mxu0 %v682
    %711 = vmatprep.subr.bf16.mxu0 0
    %712 = vmatpush1.bf16.msra.mxu0 %v681
    %713 = vmatprep.subr.bf16.mxu0 0
    %714 = vmatpush2.bf16.msra.mxu0 0
    %715 = vmatprep.subr.bf16.mxu0 0
    %716 = vmatpush2.bf16.msra.mxu0 0
    %717 = vmatprep.subr.bf16.mxu0 0
    %718 = vmatpush2.bf16.msra.mxu0 0
    %719 = vmatprep.subr.bf16.mxu0 0
    %720 = vmatpush2.bf16.msra.mxu0 0
    %721 = vmatprep.subr.bf16.mxu0 0
    %722 = vmatpush2.bf16.msra.mxu0 0
    %723 = vmatprep.subr.bf16.mxu0 0
    %724 = vmatpush2.bf16.msra.mxu0 0
    %725 = vmatprep.subr.bf16.mxu0 0
    %726 = vmatpush2.bf16.msra.mxu0 0
    %727 = vmatprep.subr.bf16.mxu0 0
    %728 = vmatpush2.bf16.msra.mxu0 0
    %729 = vmatprep.mubr.bf16.mxu0 0
    %730 = vmatmul.mubr.bf16.gmra.mxu0 %v680
    %v731 = vpop.f32.mrf.mxu0
    %v732 = vadd.f32 %v695, %v731
    %v733 = vpop.f32.mrf.mxu0
    %v734 = vpop.f32.mrf.mxu0
    %v735 = vadd.f32 %v695, %v734
    %v736 = vpop.f32.mrf.mxu0
    %737 = vdwg.mxu0
    %v738 = vadd.f32 %v732, %v605
    %v739 = vadd.f32 %v735, %v606
    %v740 = vsel %vm40, %v738, 0.0
    %741 = vadd.xlane.f32.xlu0 %v740
    %v742 = vpop.xlane.xlu0 %741
    %v743 = vsel %vm40, %v739, 0.0
    %744 = vadd.xlane.f32.xlu0 %v743
    %v745 = vpop.xlane.xlu0 %744
    %v746 = vmul.f32 %v742, %v575
    %v747 = vmul.f32 %v745, %v575
    %v748 = vsub.f32 %v738, %v746
    %v749 = vsub.f32 %v739, %v747
    %v750 = vmul.f32 %v748, %v748
    %v751 = vmul.f32 %v749, %v749
    %v752 = vsel %vm40, %v750, 0.0
    %753 = vadd.xlane.f32.xlu0 %v752
    %v754 = vpop.xlane.xlu0 %753
    %v755 = vsel %vm40, %v751, 0.0
    %756 = vadd.xlane.f32.xlu0 %v755
    %v757 = vpop.xlane.xlu0 %756
    %v758 = vmul.f32 %v754, %v575
    %v759 = vmul.f32 %v757, %v575
    %v760 = vadd.f32 %v758, 1e-05
    %v761 = vadd.f32 %v759, 1e-05
    %v762 = vrsqrt.pop %v760
    %v763 = vrsqrt.pop %v761
    %v764 = vmul.f32 %v748, %v762
    %v765 = vmul.f32 %v749, %v763
    %766 = vrot.lane.b32.xlu0 %v514, 32
    %v767 = vpop.permute.xlu0 %766
    %v769 = vmul.f32 %v764, %v767
    %v770 = vmul.f32 %v765, %v767
    %v771 = vadd.f32 %v769, %v692
    %v772 = vadd.f32 %v770, %v692
    %773 = vst.msk [vmem:[#allocation2] sm:$0xff] %vm40, %v771
    %774 = vst.msk [vmem:[#allocation2 + $0x8] sm:$0xff] %vm40, %v772
    // Predicated region
    $region26: #{transformer_block_forward.1} parent=1 // pred_check
      _
    $region27: #{transformer_block_forward.1} parent=1 // pred_check_branch
      %776 = sbr.rel (0) target = $region29
    $region28: #{transformer_block_forward.1} parent=1 // pred_region
      %s778 = ssub.s32 256, 256
      %779 = vsyncadd [#allocation3], %s778
      %s780 = sshll.u32 [#allocation2], 4
      %s781 = int_to_ptr.vmem [resolvable:$true] %s780
      %786 = dma.vmem_to_hbm [thread:$0]  %s781, 256, %s6, [#allocation3], 128, 128, 8
    $region29: #{transformer_block_forward.1} parent=1 // pred_fallthru
      _
    // Predicated region
    $region30: #{transformer_block_forward.1} parent=1 // pred_check
      _
    $region31: #{transformer_block_forward.1} parent=1 // pred_check_branch
      %788 = sbr.rel (0) target = $region33
    $region32: #{transformer_block_forward.1} parent=1 // pred_region
      %789 = dma.done [#allocation3], 256
    $region33: #{transformer_block_forward.1} parent=1 // pred_fallthru
      _
    %790 = vsyncpa [#allocation3], 1

</llo_original>
